<compile_context>
chip_gen: v6e
topology: v6e:2x2x1
jax: 0.10.0
libtpu: 0.0.40
codegen_flags: <defaults>
</compile_context>

<pallas_src>
import functools

import jax
import jax.numpy as jnp
from jax.experimental import pallas as pl
from jax.experimental.pallas import tpu as pltpu


# -----------------------------------------------------------------------------
# Mish (PyTorch softplus threshold = 20).  tanh(softplus(x)) rewritten so the
# kernel needs only exp + reciprocal on the EUP.
# -----------------------------------------------------------------------------
def _mish_fast(x):
    t = jnp.exp(jnp.minimum(x, 20.0))
    u = (1.0 + t) * (1.0 + t)
    tanh_sp = (u - 1.0) * pl.reciprocal(u + 1.0, approx=True)
    return x * tanh_sp


# -----------------------------------------------------------------------------
# Fused Conv1d -> GroupNorm -> Mish kernel (one batch tile per grid step)
# -----------------------------------------------------------------------------
def _conv1d_block_kernel(xim_ref, w_ref, prm_ref, pg_ref, s_ref, e_ref, o_ref,
                         *, inv_n):
    # xim_ref : [K*C_in, tbL]   bf16  im2col slab (lane-dense, tile of batches)
    # w_ref   : [C_out, K*C_in] bf16  flattened conv weight
    # prm_ref : [C_out, 3]      f32   (bias, gamma, beta) packed
    # pg_ref  : [C_out, C_out]  f32   group-sum operator (block diagonal 0/1)
    # s_ref   : [tbL, tb]       f32   column -> per-batch sum operator
    # e_ref   : [tb, tbL]       f32   per-batch -> column broadcast operator
    # o_ref   : [C_out, tbL]          lane-dense output slab
    prm = prm_ref[...]
    bias = prm[:, 0:1]
    gamma = prm[:, 1:2]
    beta = prm[:, 2:3]

    # Conv1d: single lane-dense MXU matmul, bf16 operands, f32 accumulation.
    y0 = jnp.dot(w_ref[...], xim_ref[...],
                 preferred_element_type=jnp.float32) + bias      # [C_out, tbL]

    Pg = pg_ref[...]
    S = s_ref[...]
    E = e_ref[...]

    # Per-(group, batch) mean, computed and broadcast back purely via MXU.
    mean = jnp.dot(Pg, jnp.dot(y0, S, preferred_element_type=jnp.float32),
                   preferred_element_type=jnp.float32) * inv_n    # [C_out, tb]
    d = y0 - jnp.dot(mean, E, preferred_element_type=jnp.float32)  # centered

    # Two-pass variance of the centered values (better numerics), f32.
    var = jnp.dot(Pg, jnp.dot(d * d, S, preferred_element_type=jnp.float32),
                  preferred_element_type=jnp.float32) * inv_n     # [C_out, tb]
    scale = jax.lax.rsqrt(var + 1e-5) * gamma                     # [C_out, tb]

    yn = d * jnp.dot(scale, E, preferred_element_type=jnp.float32) + beta
    o_ref[...] = _mish_fast(yn).astype(o_ref.dtype)               # single store


def _pick_batch_tile(B, L_out, min_cols=256, max_cols=2048):
    """Batch tile size: lane-dense (>=min_cols) matmul columns per tile while
    keeping the per-tile working set small (fits v7x's 32 MiB scoped VMEM
    with double-buffering headroom).  When tiling, tile columns must be a
    multiple of 128 and tb must divide B."""
    if B * L_out <= max_cols:
        return B                                   # single tile
    best = None
    for tb in range(1, B + 1):
        if B % tb or (tb * L_out) % 128:
            continue
        if tb * L_out > max_cols:
            break
        best = tb
        if tb * L_out >= min_cols:
            break
    return best if best is not None else B


@functools.partial(jax.jit, static_argnames=("n_groups",))
def conv1d_block(x, w, b, gamma, beta, n_groups=8):
    """Conv1dBlock.forward.

    x: [B, C_in, L]; w: [C_out, C_in, K]; b/gamma/beta: [C_out]
    returns [B, C_out, L_out] (L_out == L for odd K, PyTorch padding=K//2).
    """
    B, C_in, L = x.shape
    C_out, _, K = w.shape
    assert C_out % n_groups == 0, "GroupNorm requires C_out % n_groups == 0"
    pad = K // 2
    L_out = L + 2 * pad - K + 1
    Cg = C_out // n_groups
    KC = K * C_in

    # ---- XLA-side layout plumbing (fused/cheap, keeps the kernel lane-dense)
    xpad = jnp.pad(x, ((0, 0), (0, 0), (pad, pad)))
    # im2col[k*C_in + ci, b*L_out + l] = xpad[b, ci, l + k]
    xim = jnp.stack([xpad[:, :, k:k + L_out] for k in range(K)], axis=0)
    xim = jnp.transpose(xim, (0, 2, 1, 3)).reshape(KC, B * L_out)
    xim = xim.astype(jnp.bfloat16)                 # MXU-native, f32 accumulate
    wflat = jnp.transpose(w, (0, 2, 1)).reshape(C_out, KC).astype(jnp.bfloat16)
    params = jnp.stack([b, gamma, beta], axis=1).astype(jnp.float32)  # [C_out,3]

    tb = _pick_batch_tile(B, L_out)
    tbl = tb * L_out
    n_tiles = B // tb

    # Constant reduction / broadcast / group-sum operators (0/1, exact).
    gid = jnp.arange(C_out) // Cg
    Pg = (gid[:, None] == gid[None, :]).astype(jnp.float32)            # [C,C]
    bid = jnp.arange(tbl) // L_out
    S = (bid[:, None] == jnp.arange(tb)[None, :]).astype(jnp.float32)  # [tbl,tb]
    E = jnp.transpose(S)                                               # [tb,tbl]

    kernel = functools.partial(_conv1d_block_kernel,
                               inv_n=1.0 / float(Cg * L_out))

    out = pl.pallas_call(
        kernel,
        out_shape=jax.ShapeDtypeStruct((C_out, B * L_out), x.dtype),
        grid=(n_tiles,),
        in_specs=[
            pl.BlockSpec((KC, tbl), lambda i: (0, i)),        # im2col tile
            pl.BlockSpec((C_out, KC), lambda i: (0, 0)),      # weights (resident)
            pl.BlockSpec((C_out, 3), lambda i: (0, 0)),       # bias/gamma/beta
            pl.BlockSpec((C_out, C_out), lambda i: (0, 0)),   # P (resident)
            pl.BlockSpec((tbl, tb), lambda i: (0, 0)),        # S (resident)
            pl.BlockSpec((tb, tbl), lambda i: (0, 0)),        # E (resident)
        ],
        out_specs=pl.BlockSpec((C_out, tbl), lambda i: (0, i)),
        compiler_params=pltpu.CompilerParams(
            dimension_semantics=("parallel",)),               # shard on v7x TCs
    )(xim, wflat, params, Pg, S, E)

    # Lane-dense kernel store; final NCL transpose is cheap XLA work.
    return jnp.transpose(out.reshape(C_out, B, L_out), (1, 0, 2))


# -----------------------------------------------------------------------------
# Pure-JAX reference (correctness validation only)
# -----------------------------------------------------------------------------
def _mish_ref(x):
    sp = jnp.where(x > 20.0, x, jnp.log1p(jnp.exp(jnp.minimum(x, 20.0))))
    return x * jnp.tanh(sp)


def _reference_conv1d_block(x, w, b, gamma, beta, n_groups):
    pad = w.shape[2] // 2
    y = jax.lax.conv_general_dilated(
        x, w, window_strides=(1,), padding=[(pad, pad)],
        dimension_numbers=("NCH", "OIH", "NCH"),
        precision=jax.lax.Precision.HIGHEST)
    y = y + b[None, :, None]
    B, C, L = y.shape
    G = n_groups
    yg = y.reshape(B, G, (C // G) * L)
    mean = jnp.mean(yg, axis=2, keepdims=True)
    var = jnp.mean((yg - mean) ** 2, axis=2, keepdims=True)
    yn = ((yg - mean) * jax.lax.rsqrt(var + 1e-5)).reshape(B, C, L)
    yn = yn * gamma[None, :, None] + beta[None, :, None]
    return _mish_ref(yn)


# -----------------------------------------------------------------------------
if __name__ == "__main__":
    B, C_in, C_out, K, L, G = 2, 32, 64, 5, 16, 8

    key = jax.random.PRNGKey(0)
    k1, k2, k3, k4, k5 = jax.random.split(key, 5)
    x = jax.random.normal(k1, (B, C_in, L), dtype=jnp.float32)
    w = 0.1 * jax.random.normal(k2, (C_out, C_in, K), dtype=jnp.float32)
    b = 0.05 * jax.random.normal(k3, (C_out,), dtype=jnp.float32)
    gamma = 1.0 + 0.1 * jax.random.normal(k4, (C_out,), dtype=jnp.float32)
    beta = 0.05 * jax.random.normal(k5, (C_out,), dtype=jnp.float32)

    out = conv1d_block(x, w, b, gamma, beta, n_groups=G)
    out = jax.block_until_ready(out)

    assert out.shape == (B, C_out, L), out.shape
    assert bool(jnp.all(jnp.isfinite(out)))

    ref = _reference_conv1d_block(x, w, b, gamma, beta, G)
    max_err = float(jnp.max(jnp.abs(out - ref)))
    # Tolerance covers bf16 MXU operands (f32 accumulation / f32 GroupNorm
    # stats); real indexing bugs produce O(1) errors.
    assert max_err < 3e-2, max_err

    print("KERNEL_OK")
</pallas_src>

<mosaic_0001>
module attributes {stable_mosaic.version = 11 : i64} {
  func.func @_conv1d_block_kernel(%arg0: i32, %arg1: memref<160x32xbf16, #tpu.memory_space<vmem>>, %arg2: memref<64x160xbf16, #tpu.memory_space<vmem>>, %arg3: memref<64x3xf32, #tpu.memory_space<vmem>>, %arg4: memref<64x64xf32, #tpu.memory_space<vmem>>, %arg5: memref<32x2xf32, #tpu.memory_space<vmem>>, %arg6: memref<2x32xf32, #tpu.memory_space<vmem>>, %arg7: memref<64x32xf32, #tpu.memory_space<vmem>>) attributes {dimension_semantics = [#tpu.dimension_semantics<parallel>], iteration_bounds = array<i64: 1>, scalar_prefetch = 0 : i64, scratch_operands = 0 : i64, tpu.core_type = #tpu.core_type<tc>, window_params = [{transform_indices = @transform_0, window_bounds = array<i64: 160, 32>}, {pipeline_mode = #tpu.pipeline_mode<synchronous>, transform_indices = @transform_1, window_bounds = array<i64: 64, 160>}, {pipeline_mode = #tpu.pipeline_mode<synchronous>, transform_indices = @transform_2, window_bounds = array<i64: 64, 3>}, {pipeline_mode = #tpu.pipeline_mode<synchronous>, transform_indices = @transform_3, window_bounds = array<i64: 64, 64>}, {pipeline_mode = #tpu.pipeline_mode<synchronous>, transform_indices = @transform_4, window_bounds = array<i64: 32, 2>}, {pipeline_mode = #tpu.pipeline_mode<synchronous>, transform_indices = @transform_5, window_bounds = array<i64: 2, 32>}, {transform_indices = @transform_6, window_bounds = array<i64: 64, 32>}]} {
    %c0 = arith.constant 0 : index
    %c0_0 = arith.constant 0 : index
    %0 = vector.load %arg3[%c0, %c0_0] : memref<64x3xf32, #tpu.memory_space<vmem>>, vector<64x3xf32>
    %1 = vector.extract_strided_slice %0 {offsets = [0, 0], sizes = [64, 1], strides = [1, 1]} : vector<64x3xf32> to vector<64x1xf32>
    %2 = vector.extract_strided_slice %0 {offsets = [0, 1], sizes = [64, 1], strides = [1, 1]} : vector<64x3xf32> to vector<64x1xf32>
    %3 = vector.extract_strided_slice %0 {offsets = [0, 2], sizes = [64, 1], strides = [1, 1]} : vector<64x3xf32> to vector<64x1xf32>
    %c0_1 = arith.constant 0 : index
    %c0_2 = arith.constant 0 : index
    %4 = vector.load %arg2[%c0_1, %c0_2] : memref<64x160xbf16, #tpu.memory_space<vmem>>, vector<64x160xbf16>
    %c0_3 = arith.constant 0 : index
    %c0_4 = arith.constant 0 : index
    %5 = vector.load %arg1[%c0_3, %c0_4] : memref<160x32xbf16, #tpu.memory_space<vmem>>, vector<160x32xbf16>
    %cst = arith.constant dense<0.000000e+00> : vector<64x32xf32>
    %6 = tpu.matmul %4, %5, %cst {dimension_numbers = #tpu.dot_dimension_numbers<[1], [0], [0], [1], [0, 0, 1, 1], [], []>} : vector<64x160xbf16>, vector<160x32xbf16>, vector<64x32xf32> -> vector<64x32xf32>
    %7 = vector.broadcast %1 : vector<64x1xf32> to vector<64x32xf32>
    %8 = arith.addf %6, %7 : vector<64x32xf32>
    %c0_5 = arith.constant 0 : index
    %c0_6 = arith.constant 0 : index
    %9 = vector.load %arg4[%c0_5, %c0_6] : memref<64x64xf32, #tpu.memory_space<vmem>>, vector<64x64xf32>
    %c0_7 = arith.constant 0 : index
    %c0_8 = arith.constant 0 : index
    %10 = vector.load %arg5[%c0_7, %c0_8] : memref<32x2xf32, #tpu.memory_space<vmem>>, vector<32x2xf32>
    %c0_9 = arith.constant 0 : index
    %c0_10 = arith.constant 0 : index
    %11 = vector.load %arg6[%c0_9, %c0_10] : memref<2x32xf32, #tpu.memory_space<vmem>>, vector<2x32xf32>
    %cst_11 = arith.constant dense<0.000000e+00> : vector<64x2xf32>
    %12 = tpu.matmul %8, %10, %cst_11 {dimension_numbers = #tpu.dot_dimension_numbers<[1], [0], [0], [1], [0, 0, 1, 1], [], []>} : vector<64x32xf32>, vector<32x2xf32>, vector<64x2xf32> -> vector<64x2xf32>
    %cst_12 = arith.constant dense<0.000000e+00> : vector<64x2xf32>
    %13 = tpu.matmul %9, %12, %cst_12 {dimension_numbers = #tpu.dot_dimension_numbers<[1], [0], [0], [1], [0, 0, 1, 1], [], []>} : vector<64x64xf32>, vector<64x2xf32>, vector<64x2xf32> -> vector<64x2xf32>
    %cst_13 = arith.constant 7.812500e-03 : f32
    %14 = vector.broadcast %cst_13 : f32 to vector<64x2xf32>
    %15 = arith.mulf %13, %14 : vector<64x2xf32>
    %cst_14 = arith.constant dense<0.000000e+00> : vector<64x32xf32>
    %16 = tpu.matmul %15, %11, %cst_14 {dimension_numbers = #tpu.dot_dimension_numbers<[1], [0], [0], [1], [0, 0, 1, 1], [], []>} : vector<64x2xf32>, vector<2x32xf32>, vector<64x32xf32> -> vector<64x32xf32>
    %17 = arith.subf %8, %16 : vector<64x32xf32>
    %18 = arith.mulf %17, %17 : vector<64x32xf32>
    %cst_15 = arith.constant dense<0.000000e+00> : vector<64x2xf32>
    %19 = tpu.matmul %18, %10, %cst_15 {dimension_numbers = #tpu.dot_dimension_numbers<[1], [0], [0], [1], [0, 0, 1, 1], [], []>} : vector<64x32xf32>, vector<32x2xf32>, vector<64x2xf32> -> vector<64x2xf32>
    %cst_16 = arith.constant dense<0.000000e+00> : vector<64x2xf32>
    %20 = tpu.matmul %9, %19, %cst_16 {dimension_numbers = #tpu.dot_dimension_numbers<[1], [0], [0], [1], [0, 0, 1, 1], [], []>} : vector<64x64xf32>, vector<64x2xf32>, vector<64x2xf32> -> vector<64x2xf32>
    %cst_17 = arith.constant 7.812500e-03 : f32
    %21 = vector.broadcast %cst_17 : f32 to vector<64x2xf32>
    %22 = arith.mulf %20, %21 : vector<64x2xf32>
    %cst_18 = arith.constant 9.99999974E-6 : f32
    %23 = vector.broadcast %cst_18 : f32 to vector<64x2xf32>
    %24 = arith.addf %22, %23 : vector<64x2xf32>
    %25 = math.rsqrt %24 : vector<64x2xf32>
    %26 = vector.broadcast %2 : vector<64x1xf32> to vector<64x2xf32>
    %27 = arith.mulf %25, %26 : vector<64x2xf32>
    %cst_19 = arith.constant dense<0.000000e+00> : vector<64x32xf32>
    %28 = tpu.matmul %27, %11, %cst_19 {dimension_numbers = #tpu.dot_dimension_numbers<[1], [0], [0], [1], [0, 0, 1, 1], [], []>} : vector<64x2xf32>, vector<2x32xf32>, vector<64x32xf32> -> vector<64x32xf32>
    %29 = arith.mulf %17, %28 : vector<64x32xf32>
    %30 = vector.broadcast %3 : vector<64x1xf32> to vector<64x32xf32>
    %31 = arith.addf %29, %30 : vector<64x32xf32>
    %cst_20 = arith.constant 2.000000e+01 : f32
    %32 = vector.broadcast %cst_20 : f32 to vector<64x32xf32>
    %33 = arith.minimumf %31, %32 : vector<64x32xf32>
    %34 = math.exp %33 : vector<64x32xf32>
    %cst_21 = arith.constant 1.000000e+00 : f32
    %35 = vector.broadcast %cst_21 : f32 to vector<64x32xf32>
    %36 = arith.addf %35, %34 : vector<64x32xf32>
    %cst_22 = arith.constant 1.000000e+00 : f32
    %37 = vector.broadcast %cst_22 : f32 to vector<64x32xf32>
    %38 = arith.addf %37, %34 : vector<64x32xf32>
    %39 = arith.mulf %36, %38 : vector<64x32xf32>
    %cst_23 = arith.constant 1.000000e+00 : f32
    %40 = vector.broadcast %cst_23 : f32 to vector<64x32xf32>
    %41 = arith.subf %39, %40 : vector<64x32xf32>
    %cst_24 = arith.constant 1.000000e+00 : f32
    %42 = vector.broadcast %cst_24 : f32 to vector<64x32xf32>
    %43 = arith.addf %39, %42 : vector<64x32xf32>
    %44 = tpu.reciprocal %43 {approx = true} : vector<64x32xf32> -> vector<64x32xf32>
    %45 = arith.mulf %41, %44 : vector<64x32xf32>
    %46 = arith.mulf %31, %45 : vector<64x32xf32>
    %c0_25 = arith.constant 0 : index
    %c0_26 = arith.constant 0 : index
    %47 = vector.load %arg7[%c0_25, %c0_26] : memref<64x32xf32, #tpu.memory_space<vmem>>, vector<64x32xf32>
    tpu.vector_store %arg7[%c0_25, %c0_26], %46 {strides = array<i32>} : memref<64x32xf32, #tpu.memory_space<vmem>>, vector<64x32xf32>,
    return
  }
  func.func @transform_0(%arg0: i32) -> (i32, i32) {
    %c0_i32 = arith.constant 0 : i32
    %c0_i32_0 = arith.constant 0 : i32
    return %c0_i32, %arg0 : i32, i32
  }
  func.func @transform_1(%arg0: i32) -> (i32, i32) {
    %c0_i32 = arith.constant 0 : i32
    %c0_i32_0 = arith.constant 0 : i32
    %c0_i32_1 = arith.constant 0 : i32
    return %c0_i32, %c0_i32_0 : i32, i32
  }
  func.func @transform_2(%arg0: i32) -> (i32, i32) {
    %c0_i32 = arith.constant 0 : i32
    %c0_i32_0 = arith.constant 0 : i32
    %c0_i32_1 = arith.constant 0 : i32
    return %c0_i32, %c0_i32_0 : i32, i32
  }
  func.func @transform_3(%arg0: i32) -> (i32, i32) {
    %c0_i32 = arith.constant 0 : i32
    %c0_i32_0 = arith.constant 0 : i32
    %c0_i32_1 = arith.constant 0 : i32
    return %c0_i32, %c0_i32_0 : i32, i32
  }
  func.func @transform_4(%arg0: i32) -> (i32, i32) {
    %c0_i32 = arith.constant 0 : i32
    %c0_i32_0 = arith.constant 0 : i32
    %c0_i32_1 = arith.constant 0 : i32
    return %c0_i32, %c0_i32_0 : i32, i32
  }
  func.func @transform_5(%arg0: i32) -> (i32, i32) {
    %c0_i32 = arith.constant 0 : i32
    %c0_i32_0 = arith.constant 0 : i32
    %c0_i32_1 = arith.constant 0 : i32
    return %c0_i32, %c0_i32_0 : i32, i32
  }
  func.func @transform_6(%arg0: i32) -> (i32, i32) {
    %c0_i32 = arith.constant 0 : i32
    %c0_i32_0 = arith.constant 0 : i32
    return %c0_i32, %arg0 : i32, i32
  }
}

</mosaic_0001>

<llo_original>
// kernel: conv1d_block.1
$region0: #{conv1d_block.1}
  #allocation0 [shape = 'u32[]', space=smem, size = 0x4, offset = 0x4, fixed_abs, tag = 'smem constant byte address 0x4 - core index']
  #allocation1 [shape = 'u32[144,128]{1,0:T(1,128)}', space=vmem, size = 0x12000, scoped, tag = 'internal scratch']
  %s0 = inlined_call_operand.vmem [shape: bf16[160,32], index: 0, kind: input, shape index: {}]
  %s1 = inlined_call_operand.vmem [shape: bf16[64,160], index: 1, kind: input, shape index: {}]
  %s2 = inlined_call_operand.vmem [shape: f32[64,3], index: 2, kind: input, shape index: {}]
  %s3 = inlined_call_operand.vmem [shape: f32[64,64], index: 3, kind: input, shape index: {}]
  %s4 = inlined_call_operand.vmem [shape: f32[32,2], index: 4, kind: input, shape index: {}]
  %s5 = inlined_call_operand.vmem [shape: f32[2,32], index: 5, kind: input, shape index: {}]
  %s6 = inlined_call_operand.vmem [shape: f32[64,32], index: 6, kind: output, shape index: {}]
  %s7 = sld [smem:[#allocation0]]
  $region34: #{conv1d_block.1} parent=0
    _
  %s9 = ssub.s32 1, %s7
  %s10 = scalar_select 0, %s9, %s7
  // Predicated region
  $region2: #{conv1d_block.1} parent=0 // pred_check
    _
  $region3: #{conv1d_block.1} parent=0 // pred_check_branch
    %12 = sbr.rel (0) target = $region5
  $region4: #{conv1d_block.1} parent=0 // pred_region
    _
  $region5: #{conv1d_block.1} parent=0 // pred_fallthru
    _
  // Predicated region
  $region6: #{conv1d_block.1} parent=0 // pred_check
    _
  $region7: #{conv1d_block.1} parent=0 // pred_check_branch
    %14 = sbr.rel (0) target = $region9
  $region8: #{conv1d_block.1} parent=0 // pred_region
    _
  $region9: #{conv1d_block.1} parent=0 // pred_fallthru
    _
  // Predicated region
  $region10: #{conv1d_block.1} parent=0 // pred_check
    _
  $region11: #{conv1d_block.1} parent=0 // pred_check_branch
    %16 = sbr.rel (0) target = $region13
  $region12: #{conv1d_block.1} parent=0 // pred_region
    _
  $region13: #{conv1d_block.1} parent=0 // pred_fallthru
    _
  // Predicated region
  $region14: #{conv1d_block.1} parent=0 // pred_check
    _
  $region15: #{conv1d_block.1} parent=0 // pred_check_branch
    %18 = sbr.rel (0) target = $region17
  $region16: #{conv1d_block.1} parent=0 // pred_region
    _
  $region17: #{conv1d_block.1} parent=0 // pred_fallthru
    _
  // Predicated region
  $region18: #{conv1d_block.1} parent=0 // pred_check
    _
  $region19: #{conv1d_block.1} parent=0 // pred_check_branch
    %20 = sbr.rel (0) target = $region21
  $region20: #{conv1d_block.1} parent=0 // pred_region
    _
  $region21: #{conv1d_block.1} parent=0 // pred_fallthru
    _
  // Predicated region
  $region22: #{conv1d_block.1} parent=0 // pred_check
    _
  $region23: #{conv1d_block.1} parent=0 // pred_check_branch
    %22 = sbr.rel (0) target = $region25
  $region24: #{conv1d_block.1} parent=0 // pred_region
    _
  $region25: #{conv1d_block.1} parent=0 // pred_fallthru
    _
  %v24 = vld [vmem:[%s2] sm:$0xff]
  %v25 = vld [vmem:[%s2 + $0x8] sm:$0xff]
  %v26 = vld [vmem:[%s2 + $0x10] sm:$0xff]
  %v27 = vld [vmem:[%s2 + $0x18] sm:$0xff]
  %v28 = vld [vmem:[%s2 + $0x20] sm:$0xff]
  %v29 = vld [vmem:[%s2 + $0x28] sm:$0xff]
  %v30 = vld [vmem:[%s2 + $0x30] sm:$0xff]
  %v31 = vld [vmem:[%s2 + $0x38] sm:$0xff]
  %v32 = vld [vmem:[%s1] sm:$0xff]
  %v33 = vld [vmem:[%s1 + $0x8] sm:$0xff]
  %v34 = vld [vmem:[%s1 + $0x10] sm:$0xff]
  %v35 = vld [vmem:[%s1 + $0x18] sm:$0xff]
  %v36 = vld [vmem:[%s1 + $0x20] sm:$0xff]
  %v37 = vld [vmem:[%s1 + $0x28] sm:$0xff]
  %v38 = vld [vmem:[%s1 + $0x30] sm:$0xff]
  %v39 = vld [vmem:[%s1 + $0x38] sm:$0xff]
  %v40 = vld [vmem:[%s0] sm:$0xf]
  %v41 = vld [vmem:[%s0 + $0x4] sm:$0xf]
  %v42 = vld [vmem:[%s0 + $0x8] sm:$0xf]
  %v43 = vld [vmem:[%s0 + $0xc] sm:$0xf]
  %v44 = vld [vmem:[%s0 + $0x10] sm:$0xf]
  %v45 = vld [vmem:[%s0 + $0x14] sm:$0xf]
  %v46 = vld [vmem:[%s0 + $0x18] sm:$0xf]
  %v47 = vld [vmem:[%s0 + $0x1c] sm:$0xf]
  %v48 = vld [vmem:[%s0 + $0x20] sm:$0xf]
  %v49 = vld [vmem:[%s0 + $0x24] sm:$0xf]
  %v50 = vld [vmem:[%s0 + $0x28] sm:$0xf]
  %v51 = vld [vmem:[%s0 + $0x2c] sm:$0xf]
  %v52 = vld [vmem:[%s0 + $0x30] sm:$0xf]
  %v53 = vld [vmem:[%s0 + $0x34] sm:$0xf]
  %v54 = vld [vmem:[%s0 + $0x38] sm:$0xf]
  %v55 = vld [vmem:[%s0 + $0x3c] sm:$0xf]
  %v56 = vld [vmem:[%s0 + $0x40] sm:$0xf]
  %v57 = vld [vmem:[%s0 + $0x44] sm:$0xf]
  %v58 = vld [vmem:[%s0 + $0x48] sm:$0xf]
  %v59 = vld [vmem:[%s0 + $0x4c] sm:$0xf]
  %61 = vset.pattern.permute.xlu0 0
  %62 = vperm.xlu0 %61, %v24
  %v63 = vpop.permute.xlu0 %62
  %66 = vset.pattern.permute.xlu0 0
  %67 = vperm.xlu0 %66, %v25
  %v68 = vpop.permute.xlu0 %67
  %71 = vset.pattern.permute.xlu0 0
  %72 = vperm.xlu0 %71, %v26
  %v73 = vpop.permute.xlu0 %72
  %76 = vset.pattern.permute.xlu0 0
  %77 = vperm.xlu0 %76, %v27
  %v78 = vpop.permute.xlu0 %77
  %81 = vset.pattern.permute.xlu0 0
  %82 = vperm.xlu0 %81, %v28
  %v83 = vpop.permute.xlu0 %82
  %86 = vset.pattern.permute.xlu0 0
  %87 = vperm.xlu0 %86, %v29
  %v88 = vpop.permute.xlu0 %87
  %91 = vset.pattern.permute.xlu0 0
  %92 = vperm.xlu0 %91, %v30
  %v93 = vpop.permute.xlu0 %92
  %96 = vset.pattern.permute.xlu0 0
  %97 = vperm.xlu0 %96, %v31
  %v98 = vpop.permute.xlu0 %97
  %v108 = vunpack.c.l.b16 %v32
  %v109 = vunpack.c.h.b16 %v32
  %v110 = vunpack.c.l.b16 %v33
  %v111 = vunpack.c.h.b16 %v33
  %v112 = vunpack.c.l.b16 %v34
  %v113 = vunpack.c.h.b16 %v34
  %v114 = vunpack.c.l.b16 %v35
  %v115 = vunpack.c.h.b16 %v35
  %v116 = vunpack.c.l.b16 %v36
  %v117 = vunpack.c.h.b16 %v36
  %v118 = vunpack.c.l.b16 %v37
  %v119 = vunpack.c.h.b16 %v37
  %v120 = vunpack.c.l.b16 %v38
  %v121 = vunpack.c.h.b16 %v38
  %v122 = vunpack.c.l.b16 %v39
  %v123 = vunpack.c.h.b16 %v39
  %v124 = vpack.c.b16 %v110, %v108
  %v125 = vpack.c.b16 %v111, %v109
  %v126 = vpack.c.b16 %v114, %v112
  %v127 = vpack.c.b16 %v115, %v113
  %v128 = vpack.c.b16 %v118, %v116
  %v129 = vpack.c.b16 %v119, %v117
  %v130 = vpack.c.b16 %v122, %v120
  %v131 = vpack.c.b16 %v123, %v121
  %v156 = vunpack.c.l.b16 %v40
  %v157 = vunpack.c.l.b16 %v41
  %v158 = vunpack.c.l.b16 %v42
  %v159 = vunpack.c.l.b16 %v43
  %v160 = vunpack.c.l.b16 %v44
  %v161 = vunpack.c.l.b16 %v45
  %v162 = vunpack.c.l.b16 %v46
  %v163 = vunpack.c.l.b16 %v47
  %v164 = vunpack.c.l.b16 %v48
  %v165 = vunpack.c.l.b16 %v49
  %v166 = vunpack.c.l.b16 %v50
  %v167 = vunpack.c.l.b16 %v51
  %v168 = vunpack.c.l.b16 %v52
  %v169 = vunpack.c.l.b16 %v53
  %v170 = vunpack.c.l.b16 %v54
  %v171 = vunpack.c.l.b16 %v55
  %v172 = vunpack.c.l.b16 %v56
  %v173 = vunpack.c.l.b16 %v57
  %v174 = vunpack.c.l.b16 %v58
  %v175 = vunpack.c.l.b16 %v59
  %v176 = vpack.c.b16 %v157, %v156
  %v177 = vpack.c.b16 %v159, %v158
  %v178 = vpack.c.b16 %v161, %v160
  %v179 = vpack.c.b16 %v163, %v162
  %v180 = vpack.c.b16 %v165, %v164
  %v181 = vpack.c.b16 %v167, %v166
  %v182 = vpack.c.b16 %v169, %v168
  %v183 = vpack.c.b16 %v171, %v170
  %v184 = vpack.c.b16 %v173, %v172
  %v185 = vpack.c.b16 %v175, %v174
  %vm196 = vcmask 261120
  %v198 = vsel %vm196, %v125, 0
  %v201 = vsel %vm196, %v127, 0
  %v204 = vsel %vm196, %v129, 0
  %v207 = vsel %vm196, %v131, 0
  %209 = vmatprep.subr.bf16.mxu0 0
  %210 = vmatpush1.bf16.msra.mxu0 %v183
  %211 = vmatprep.subr.bf16.mxu0 0
  %212 = vmatpush1.bf16.msra.mxu0 %v182
  %213 = vmatprep.subr.bf16.mxu0 0
  %214 = vmatpush1.bf16.msra.mxu0 %v181
  %215 = vmatprep.subr.bf16.mxu0 0
  %216 = vmatpush1.bf16.msra.mxu0 %v180
  %217 = vmatprep.subr.bf16.mxu0 0
  %218 = vmatpush1.bf16.msra.mxu0 %v179
  %219 = vmatprep.subr.bf16.mxu0 0
  %220 = vmatpush1.bf16.msra.mxu0 %v178
  %221 = vmatprep.subr.bf16.mxu0 0
  %222 = vmatpush1.bf16.msra.mxu0 %v177
  %223 = vmatprep.subr.bf16.mxu0 0
  %224 = vmatpush1.bf16.msra.mxu0 %v176
  %225 = vmatprep.subr.bf16.mxu0 0
  %226 = vmatpush2.bf16.msra.mxu0 0
  %227 = vmatprep.subr.bf16.mxu0 0
  %228 = vmatpush2.bf16.msra.mxu0 0
  %229 = vmatprep.subr.bf16.mxu0 0
  %230 = vmatpush2.bf16.msra.mxu0 0
  %231 = vmatprep.subr.bf16.mxu0 0
  %232 = vmatpush2.bf16.msra.mxu0 0
  %233 = vmatprep.subr.bf16.mxu0 0
  %234 = vmatpush2.bf16.msra.mxu0 0
  %235 = vmatprep.subr.bf16.mxu0 0
  %236 = vmatpush2.bf16.msra.mxu0 0
  %237 = vmatprep.subr.bf16.mxu0 0
  %238 = vmatpush2.bf16.msra.mxu0 %v185
  %239 = vmatprep.subr.bf16.mxu0 0
  %240 = vmatpush2.bf16.msra.mxu0 %v184
  %241 = vmatprep.mubr.bf16.mxu0 %v198
  %242 = vmatmul.mubr.bf16.gmra.mxu0 %v124
  %v243 = vpop.f32.mrf.mxu0
  %v244 = vadd.f32 %v63, %v243
  %v245 = vpop.f32.mrf.mxu0
  %v246 = vpop.f32.mrf.mxu0
  %v247 = vadd.f32 %v68, %v246
  %v248 = vpop.f32.mrf.mxu0
  %249 = vmatprep.mubr.bf16.mxu0 %v201
  %250 = vmatmul.mubr.bf16.gmra.mxu0 %v126
  %v251 = vpop.f32.mrf.mxu0
  %v252 = vadd.f32 %v73, %v251
  %v253 = vpop.f32.mrf.mxu0
  %v254 = vpop.f32.mrf.mxu0
  %v255 = vadd.f32 %v78, %v254
  %v256 = vpop.f32.mrf.mxu0
  %257 = vmatprep.mubr.bf16.mxu0 %v204
  %258 = vmatmul.mubr.bf16.gmra.mxu0 %v128
  %v259 = vpop.f32.mrf.mxu0
  %v260 = vadd.f32 %v83, %v259
  %v261 = vpop.f32.mrf.mxu0
  %v262 = vpop.f32.mrf.mxu0
  %v263 = vadd.f32 %v88, %v262
  %v264 = vpop.f32.mrf.mxu0
  %265 = vmatprep.mubr.bf16.mxu0 %v207
  %266 = vmatmul.mubr.bf16.gmra.mxu0 %v130
  %v267 = vpop.f32.mrf.mxu0
  %v268 = vadd.f32 %v93, %v267
  %v269 = vpop.f32.mrf.mxu0
  %v270 = vpop.f32.mrf.mxu0
  %v271 = vadd.f32 %v98, %v270
  %v272 = vpop.f32.mrf.mxu0
  %273 = vdwg.mxu0
  %v274 = vld [vmem:[%s3] sm:$0xff]
  %v275 = vld [vmem:[%s3 + $0x8] sm:$0xff]
  %v276 = vld [vmem:[%s3 + $0x10] sm:$0xff]
  %v277 = vld [vmem:[%s3 + $0x18] sm:$0xff]
  %v278 = vld [vmem:[%s3 + $0x20] sm:$0xff]
  %v279 = vld [vmem:[%s3 + $0x28] sm:$0xff]
  %v280 = vld [vmem:[%s3 + $0x30] sm:$0xff]
  %v281 = vld [vmem:[%s3 + $0x38] sm:$0xff]
  %v282 = vld [vmem:[%s4] sm:$0xff]
  %v283 = vld [vmem:[%s4 + $0x8] sm:$0xff]
  %v284 = vld [vmem:[%s4 + $0x10] sm:$0xff]
  %v285 = vld [vmem:[%s4 + $0x18] sm:$0xff]
  %v286 = vld [vmem:[%s5] sm:$0x3]
  %v288 = vsel %vm196, %v244, 0
  %v291 = vsel %vm196, %v247, 0
  %v294 = vsel %vm196, %v252, 0
  %v297 = vsel %vm196, %v255, 0
  %v300 = vsel %vm196, %v260, 0
  %v303 = vsel %vm196, %v263, 0
  %v306 = vsel %vm196, %v268, 0
  %v309 = vsel %vm196, %v271, 0
  %311 = vmatprep.subr.mxu0 0.0
  %312 = vmatpush1.msra.mxu0 0.0
  %313 = vmatprep.subr.mxu0 0.0
  %314 = vmatpush1.msra.mxu0 0.0
  %315 = vmatprep.subr.mxu0 0.0
  %316 = vmatpush1.msra.mxu0 0.0
  %317 = vmatprep.subr.mxu0 0.0
  %318 = vmatpush1.msra.mxu0 0.0
  %319 = vmatprep.subr.mxu0 0.0
  %320 = vmatpush1.msra.mxu0 0.0
  %321 = vmatprep.subr.mxu0 0.0
  %322 = vmatpush1.msra.mxu0 0.0
  %323 = vmatprep.subr.mxu0 0.0
  %324 = vmatpush1.msra.mxu0 0.0
  %325 = vmatprep.subr.mxu0 0.0
  %326 = vmatpush1.msra.mxu0 0.0
  %327 = vmatprep.subr.mxu0 0.0
  %328 = vmatpush1.msra.mxu0 0.0
  %329 = vmatprep.subr.mxu0 0.0
  %330 = vmatpush1.msra.mxu0 0.0
  %331 = vmatprep.subr.mxu0 0.0
  %332 = vmatpush1.msra.mxu0 0.0
  %333 = vmatprep.subr.mxu0 0.0
  %334 = vmatpush1.msra.mxu0 0.0
  %335 = vmatprep.subr.mxu0 0.0
  %336 = vmatpush1.msra.mxu0 %v285
  %337 = vmatprep.subr.mxu0 0.0
  %338 = vmatpush1.msra.mxu0 %v284
  %339 = vmatprep.subr.mxu0 0.0
  %340 = vmatpush1.msra.mxu0 %v283
  %341 = vmatprep.subr.mxu0 0.0
  %342 = vmatpush1.msra.mxu0 %v282
  %343 = vmatprep.subr.mxu0 0.0
  %344 = vmatpush2.msra.mxu0 0.0
  %345 = vmatprep.subr.mxu0 0.0
  %346 = vmatpush2.msra.mxu0 0.0
  %347 = vmatprep.subr.mxu0 0.0
  %348 = vmatpush2.msra.mxu0 0.0
  %349 = vmatprep.subr.mxu0 0.0
  %350 = vmatpush2.msra.mxu0 0.0
  %351 = vmatprep.subr.mxu0 0.0
  %352 = vmatpush2.msra.mxu0 0.0
  %353 = vmatprep.subr.mxu0 0.0
  %354 = vmatpush2.msra.mxu0 0.0
  %355 = vmatprep.subr.mxu0 0.0
  %356 = vmatpush2.msra.mxu0 0.0
  %357 = vmatprep.subr.mxu0 0.0
  %358 = vmatpush2.msra.mxu0 0.0
  %359 = vmatprep.subr.mxu0 0.0
  %360 = vmatpush2.msra.mxu0 0.0
  %361 = vmatprep.subr.mxu0 0.0
  %362 = vmatpush2.msra.mxu0 0.0
  %363 = vmatprep.subr.mxu0 0.0
  %364 = vmatpush2.msra.mxu0 0.0
  %365 = vmatprep.subr.mxu0 0.0
  %366 = vmatpush2.msra.mxu0 0.0
  %367 = vmatprep.subr.mxu0 0.0
  %368 = vmatpush2.msra.mxu0 0.0
  %369 = vmatprep.subr.mxu0 0.0
  %370 = vmatpush2.msra.mxu0 0.0
  %371 = vmatprep.subr.mxu0 0.0
  %372 = vmatpush2.msra.mxu0 0.0
  %373 = vmatprep.subr.mxu0 0.0
  %374 = vmatpush2.msra.mxu0 0.0
  %375 = vmatprep.mubr.f32.mxu0 0.0
  %376 = vmatmul.mubr.f32.gmra.mxu0 %v288
  %v377 = vpop.f32.mrf.mxu0
  %v378 = vadd.f32 0.0, %v377
  %v379 = vpop.f32.mrf.mxu0
  %380 = vmatprep.mubr.f32.mxu0 0.0
  %381 = vmatmul.mubr.f32.gmra.mxu0 %v291
  %v382 = vpop.f32.mrf.mxu0
  %v383 = vadd.f32 0.0, %v382
  %v384 = vpop.f32.mrf.mxu0
  %385 = vmatprep.mubr.f32.mxu0 0.0
  %386 = vmatmul.mubr.f32.gmra.mxu0 %v294
  %v387 = vpop.f32.mrf.mxu0
  %v388 = vadd.f32 0.0, %v387
  %v389 = vpop.f32.mrf.mxu0
  %390 = vmatprep.mubr.f32.mxu0 0.0
  %391 = vmatmul.mubr.f32.gmra.mxu0 %v297
  %v392 = vpop.f32.mrf.mxu0
  %v393 = vadd.f32 0.0, %v392
  %v394 = vpop.f32.mrf.mxu0
  %395 = vmatprep.mubr.f32.mxu0 0.0
  %396 = vmatmul.mubr.f32.gmra.mxu0 %v300
  %v397 = vpop.f32.mrf.mxu0
  %v398 = vadd.f32 0.0, %v397
  %v399 = vpop.f32.mrf.mxu0
  %400 = vmatprep.mubr.f32.mxu0 0.0
  %401 = vmatmul.mubr.f32.gmra.mxu0 %v303
  %v402 = vpop.f32.mrf.mxu0
  %v403 = vadd.f32 0.0, %v402
  %v404 = vpop.f32.mrf.mxu0
  %405 = vmatprep.mubr.f32.mxu0 0.0
  %406 = vmatmul.mubr.f32.gmra.mxu0 %v306
  %v407 = vpop.f32.mrf.mxu0
  %v408 = vadd.f32 0.0, %v407
  %v409 = vpop.f32.mrf.mxu0
  %410 = vmatprep.mubr.f32.mxu0 0.0
  %411 = vmatmul.mubr.f32.gmra.mxu0 %v309
  %v412 = vpop.f32.mrf.mxu0
  %v413 = vadd.f32 0.0, %v412
  %v414 = vpop.f32.mrf.mxu0
  %415 = vdwg.mxu0
  %vm416 = vcmask 523264
  %v418 = vsel %vm416, %v274, 0
  %v421 = vsel %vm416, %v275, 0
  %v424 = vsel %vm416, %v276, 0
  %v427 = vsel %vm416, %v277, 0
  %v430 = vsel %vm416, %v278, 0
  %v433 = vsel %vm416, %v279, 0
  %v436 = vsel %vm416, %v280, 0
  %v439 = vsel %vm416, %v281, 0
  %441 = vmatprep.subr.mxu0 0.0
  %442 = vmatpush1.msra.mxu0 0.0
  %443 = vmatprep.subr.mxu0 0.0
  %444 = vmatpush1.msra.mxu0 0.0
  %445 = vmatprep.subr.mxu0 0.0
  %446 = vmatpush1.msra.mxu0 0.0
  %447 = vmatprep.subr.mxu0 0.0
  %448 = vmatpush1.msra.mxu0 0.0
  %449 = vmatprep.subr.mxu0 0.0
  %450 = vmatpush1.msra.mxu0 0.0
  %451 = vmatprep.subr.mxu0 0.0
  %452 = vmatpush1.msra.mxu0 0.0
  %453 = vmatprep.subr.mxu0 0.0
  %454 = vmatpush1.msra.mxu0 0.0
  %455 = vmatprep.subr.mxu0 0.0
  %456 = vmatpush1.msra.mxu0 0.0
  %457 = vmatprep.subr.mxu0 0.0
  %458 = vmatpush1.msra.mxu0 %v413
  %459 = vmatprep.subr.mxu0 0.0
  %460 = vmatpush1.msra.mxu0 %v408
  %461 = vmatprep.subr.mxu0 0.0
  %462 = vmatpush1.msra.mxu0 %v403
  %463 = vmatprep.subr.mxu0 0.0
  %464 = vmatpush1.msra.mxu0 %v398
  %465 = vmatprep.subr.mxu0 0.0
  %466 = vmatpush1.msra.mxu0 %v393
  %467 = vmatprep.subr.mxu0 0.0
  %468 = vmatpush1.msra.mxu0 %v388
  %469 = vmatprep.subr.mxu0 0.0
  %470 = vmatpush1.msra.mxu0 %v383
  %471 = vmatprep.subr.mxu0 0.0
  %472 = vmatpush1.msra.mxu0 %v378
  %473 = vmatprep.subr.mxu0 0.0
  %474 = vmatpush2.msra.mxu0 0.0
  %475 = vmatprep.subr.mxu0 0.0
  %476 = vmatpush2.msra.mxu0 0.0
  %477 = vmatprep.subr.mxu0 0.0
  %478 = vmatpush2.msra.mxu0 0.0
  %479 = vmatprep.subr.mxu0 0.0
  %480 = vmatpush2.msra.mxu0 0.0
  %481 = vmatprep.subr.mxu0 0.0
  %482 = vmatpush2.msra.mxu0 0.0
  %483 = vmatprep.subr.mxu0 0.0
  %484 = vmatpush2.msra.mxu0 0.0
  %485 = vmatprep.subr.mxu0 0.0
  %486 = vmatpush2.msra.mxu0 0.0
  %487 = vmatprep.subr.mxu0 0.0
  %488 = vmatpush2.msra.mxu0 0.0
  %489 = vmatprep.subr.mxu0 0.0
  %490 = vmatpush2.msra.mxu0 0.0
  %491 = vmatprep.subr.mxu0 0.0
  %492 = vmatpush2.msra.mxu0 0.0
  %493 = vmatprep.subr.mxu0 0.0
  %494 = vmatpush2.msra.mxu0 0.0
  %495 = vmatprep.subr.mxu0 0.0
  %496 = vmatpush2.msra.mxu0 0.0
  %497 = vmatprep.subr.mxu0 0.0
  %498 = vmatpush2.msra.mxu0 0.0
  %499 = vmatprep.subr.mxu0 0.0
  %500 = vmatpush2.msra.mxu0 0.0
  %501 = vmatprep.subr.mxu0 0.0
  %502 = vmatpush2.msra.mxu0 0.0
  %503 = vmatprep.subr.mxu0 0.0
  %504 = vmatpush2.msra.mxu0 0.0
  %505 = vmatprep.mubr.f32.mxu0 0.0
  %506 = vmatmul.mubr.f32.gmra.mxu0 %v418
  %v507 = vpop.f32.mrf.mxu0
  %v508 = vadd.f32 0.0, %v507
  %v509 = vpop.f32.mrf.mxu0
  %510 = vmatprep.mubr.f32.mxu0 0.0
  %511 = vmatmul.mubr.f32.gmra.mxu0 %v421
  %v512 = vpop.f32.mrf.mxu0
  %v513 = vadd.f32 0.0, %v512
  %v514 = vpop.f32.mrf.mxu0
  %515 = vmatprep.mubr.f32.mxu0 0.0
  %516 = vmatmul.mubr.f32.gmra.mxu0 %v424
  %v517 = vpop.f32.mrf.mxu0
  %v518 = vadd.f32 0.0, %v517
  %v519 = vpop.f32.mrf.mxu0
  %520 = vmatprep.mubr.f32.mxu0 0.0
  %521 = vmatmul.mubr.f32.gmra.mxu0 %v427
  %v522 = vpop.f32.mrf.mxu0
  %v523 = vadd.f32 0.0, %v522
  %v524 = vpop.f32.mrf.mxu0
  %525 = vmatprep.mubr.f32.mxu0 0.0
  %526 = vmatmul.mubr.f32.gmra.mxu0 %v430
  %v527 = vpop.f32.mrf.mxu0
  %v528 = vadd.f32 0.0, %v527
  %v529 = vpop.f32.mrf.mxu0
  %530 = vmatprep.mubr.f32.mxu0 0.0
  %531 = vmatmul.mubr.f32.gmra.mxu0 %v433
  %v532 = vpop.f32.mrf.mxu0
  %v533 = vadd.f32 0.0, %v532
  %v534 = vpop.f32.mrf.mxu0
  %535 = vmatprep.mubr.f32.mxu0 0.0
  %536 = vmatmul.mubr.f32.gmra.mxu0 %v436
  %v537 = vpop.f32.mrf.mxu0
  %v538 = vadd.f32 0.0, %v537
  %v539 = vpop.f32.mrf.mxu0
  %540 = vmatprep.mubr.f32.mxu0 0.0
  %541 = vmatmul.mubr.f32.gmra.mxu0 %v439
  %v542 = vpop.f32.mrf.mxu0
  %v543 = vadd.f32 0.0, %v542
  %v544 = vpop.f32.mrf.mxu0
  %545 = vdwg.mxu0
  %v546 = vmul.f32 %v508, 0.0078125
  %v547 = vmul.f32 %v513, 0.0078125
  %v548 = vmul.f32 %v518, 0.0078125
  %v549 = vmul.f32 %v523, 0.0078125
  %v550 = vmul.f32 %v528, 0.0078125
  %v551 = vmul.f32 %v533, 0.0078125
  %v552 = vmul.f32 %v538, 0.0078125
  %v553 = vmul.f32 %v543, 0.0078125
  %vm554 = vcmask 15360
  %v556 = vsel %vm554, %v546, 0
  %v559 = vsel %vm554, %v547, 0
  %v562 = vsel %vm554, %v548, 0
  %v565 = vsel %vm554, %v549, 0
  %v568 = vsel %vm554, %v550, 0
  %v571 = vsel %vm554, %v551, 0
  %v574 = vsel %vm554, %v552, 0
  %v577 = vsel %vm554, %v553, 0
  %vm579 = vcmask 1041408
  %v581 = vsel %vm579, %v286, 0
  %583 = vmatprep.subr.mxu0 0.0
  %584 = vmatpush1.msra.mxu0 0.0
  %585 = vmatprep.subr.mxu0 0.0
  %586 = vmatpush1.msra.mxu0 0.0
  %587 = vmatprep.subr.mxu0 0.0
  %588 = vmatpush1.msra.mxu0 0.0
  %589 = vmatprep.subr.mxu0 0.0
  %590 = vmatpush1.msra.mxu0 0.0
  %591 = vmatprep.subr.mxu0 0.0
  %592 = vmatpush1.msra.mxu0 0.0
  %593 = vmatprep.subr.mxu0 0.0
  %594 = vmatpush1.msra.mxu0 0.0
  %595 = vmatprep.subr.mxu0 0.0
  %596 = vmatpush1.msra.mxu0 0.0
  %597 = vmatprep.subr.mxu0 0.0
  %598 = vmatpush1.msra.mxu0 0.0
  %599 = vmatprep.subr.mxu0 0.0
  %600 = vmatpush1.msra.mxu0 0.0
  %601 = vmatprep.subr.mxu0 0.0
  %602 = vmatpush1.msra.mxu0 0.0
  %603 = vmatprep.subr.mxu0 0.0
  %604 = vmatpush1.msra.mxu0 0.0
  %605 = vmatprep.subr.mxu0 0.0
  %606 = vmatpush1.msra.mxu0 0.0
  %607 = vmatprep.subr.mxu0 0.0
  %608 = vmatpush1.msra.mxu0 0.0
  %609 = vmatprep.subr.mxu0 0.0
  %610 = vmatpush1.msra.mxu0 0.0
  %611 = vmatprep.subr.mxu0 0.0
  %612 = vmatpush1.msra.mxu0 0.0
  %613 = vmatprep.subr.mxu0 0.0
  %614 = vmatpush1.msra.mxu0 %v581
  %615 = vmatprep.subr.mxu0 0.0
  %616 = vmatpush2.msra.mxu0 0.0
  %617 = vmatprep.subr.mxu0 0.0
  %618 = vmatpush2.msra.mxu0 0.0
  %619 = vmatprep.subr.mxu0 0.0
  %620 = vmatpush2.msra.mxu0 0.0
  %621 = vmatprep.subr.mxu0 0.0
  %622 = vmatpush2.msra.mxu0 0.0
  %623 = vmatprep.subr.mxu0 0.0
  %624 = vmatpush2.msra.mxu0 0.0
  %625 = vmatprep.subr.mxu0 0.0
  %626 = vmatpush2.msra.mxu0 0.0
  %627 = vmatprep.subr.mxu0 0.0
  %628 = vmatpush2.msra.mxu0 0.0
  %629 = vmatprep.subr.mxu0 0.0
  %630 = vmatpush2.msra.mxu0 0.0
  %631 = vmatprep.subr.mxu0 0.0
  %632 = vmatpush2.msra.mxu0 0.0
  %633 = vmatprep.subr.mxu0 0.0
  %634 = vmatpush2.msra.mxu0 0.0
  %635 = vmatprep.subr.mxu0 0.0
  %636 = vmatpush2.msra.mxu0 0.0
  %637 = vmatprep.subr.mxu0 0.0
  %638 = vmatpush2.msra.mxu0 0.0
  %639 = vmatprep.subr.mxu0 0.0
  %640 = vmatpush2.msra.mxu0 0.0
  %641 = vmatprep.subr.mxu0 0.0
  %642 = vmatpush2.msra.mxu0 0.0
  %643 = vmatprep.subr.mxu0 0.0
  %644 = vmatpush2.msra.mxu0 0.0
  %645 = vmatprep.subr.mxu0 0.0
  %646 = vmatpush2.msra.mxu0 0.0
  %647 = vmatprep.mubr.f32.mxu0 0.0
  %648 = vmatmul.mubr.f32.gmra.mxu0 %v556
  %v649 = vpop.f32.mrf.mxu0
  %v650 = vadd.f32 0.0, %v649
  %v651 = vpop.f32.mrf.mxu0
  %652 = vmatprep.mubr.f32.mxu0 0.0
  %653 = vmatmul.mubr.f32.gmra.mxu0 %v559
  %v654 = vpop.f32.mrf.mxu0
  %v655 = vadd.f32 0.0, %v654
  %v656 = vpop.f32.mrf.mxu0
  %657 = vmatprep.mubr.f32.mxu0 0.0
  %658 = vmatmul.mubr.f32.gmra.mxu0 %v562
  %v659 = vpop.f32.mrf.mxu0
  %v660 = vadd.f32 0.0, %v659
  %v661 = vpop.f32.mrf.mxu0
  %662 = vmatprep.mubr.f32.mxu0 0.0
  %663 = vmatmul.mubr.f32.gmra.mxu0 %v565
  %v664 = vpop.f32.mrf.mxu0
  %v665 = vadd.f32 0.0, %v664
  %v666 = vpop.f32.mrf.mxu0
  %667 = vmatprep.mubr.f32.mxu0 0.0
  %668 = vmatmul.mubr.f32.gmra.mxu0 %v568
  %v669 = vpop.f32.mrf.mxu0
  %v670 = vadd.f32 0.0, %v669
  %v671 = vpop.f32.mrf.mxu0
  %672 = vmatprep.mubr.f32.mxu0 0.0
  %673 = vmatmul.mubr.f32.gmra.mxu0 %v571
  %v674 = vpop.f32.mrf.mxu0
  %v675 = vadd.f32 0.0, %v674
  %v676 = vpop.f32.mrf.mxu0
  %677 = vmatprep.mubr.f32.mxu0 0.0
  %678 = vmatmul.mubr.f32.gmra.mxu0 %v574
  %v679 = vpop.f32.mrf.mxu0
  %v680 = vadd.f32 0.0, %v679
  %v681 = vpop.f32.mrf.mxu0
  %682 = vmatprep.mubr.f32.mxu0 0.0
  %683 = vmatmul.mubr.f32.gmra.mxu0 %v577
  %v684 = vpop.f32.mrf.mxu0
  %v685 = vadd.f32 0.0, %v684
  %v686 = vpop.f32.mrf.mxu0
  %687 = vdwg.mxu0
  %v688 = vsub.f32 %v244, %v650
  %v689 = vsub.f32 %v247, %v655
  %v690 = vsub.f32 %v252, %v660
  %v691 = vsub.f32 %v255, %v665
  %v692 = vsub.f32 %v260, %v670
  %v693 = vsub.f32 %v263, %v675
  %v694 = vsub.f32 %v268, %v680
  %v695 = vsub.f32 %v271, %v685
  %v696 = vmul.f32 %v688, %v688
  %v697 = vmul.f32 %v689, %v689
  %v698 = vmul.f32 %v690, %v690
  %v699 = vmul.f32 %v691, %v691
  %v700 = vmul.f32 %v692, %v692
  %v701 = vmul.f32 %v693, %v693
  %v702 = vmul.f32 %v694, %v694
  %v703 = vmul.f32 %v695, %v695
  %v705 = vsel %vm196, %v696, 0
  %v708 = vsel %vm196, %v697, 0
  %v711 = vsel %vm196, %v698, 0
  %v714 = vsel %vm196, %v699, 0
  %v717 = vsel %vm196, %v700, 0
  %v720 = vsel %vm196, %v701, 0
  %v723 = vsel %vm196, %v702, 0
  %v726 = vsel %vm196, %v703, 0
  %728 = vmatprep.subr.mxu0 0.0
  %729 = vmatpush1.msra.mxu0 0.0
  %730 = vmatprep.subr.mxu0 0.0
  %731 = vmatpush1.msra.mxu0 0.0
  %732 = vmatprep.subr.mxu0 0.0
  %733 = vmatpush1.msra.mxu0 0.0
  %734 = vmatprep.subr.mxu0 0.0
  %735 = vmatpush1.msra.mxu0 0.0
  %736 = vmatprep.subr.mxu0 0.0
  %737 = vmatpush1.msra.mxu0 0.0
  %738 = vmatprep.subr.mxu0 0.0
  %739 = vmatpush1.msra.mxu0 0.0
  %740 = vmatprep.subr.mxu0 0.0
  %741 = vmatpush1.msra.mxu0 0.0
  %742 = vmatprep.subr.mxu0 0.0
  %743 = vmatpush1.msra.mxu0 0.0
  %744 = vmatprep.subr.mxu0 0.0
  %745 = vmatpush1.msra.mxu0 0.0
  %746 = vmatprep.subr.mxu0 0.0
  %747 = vmatpush1.msra.mxu0 0.0
  %748 = vmatprep.subr.mxu0 0.0
  %749 = vmatpush1.msra.mxu0 0.0
  %750 = vmatprep.subr.mxu0 0.0
  %751 = vmatpush1.msra.mxu0 0.0
  %752 = vmatprep.subr.mxu0 0.0
  %753 = vmatpush1.msra.mxu0 %v285
  %754 = vmatprep.subr.mxu0 0.0
  %755 = vmatpush1.msra.mxu0 %v284
  %756 = vmatprep.subr.mxu0 0.0
  %757 = vmatpush1.msra.mxu0 %v283
  %758 = vmatprep.subr.mxu0 0.0
  %759 = vmatpush1.msra.mxu0 %v282
  %760 = vmatprep.subr.mxu0 0.0
  %761 = vmatpush2.msra.mxu0 0.0
  %762 = vmatprep.subr.mxu0 0.0
  %763 = vmatpush2.msra.mxu0 0.0
  %764 = vmatprep.subr.mxu0 0.0
  %765 = vmatpush2.msra.mxu0 0.0
  %766 = vmatprep.subr.mxu0 0.0
  %767 = vmatpush2.msra.mxu0 0.0
  %768 = vmatprep.subr.mxu0 0.0
  %769 = vmatpush2.msra.mxu0 0.0
  %770 = vmatprep.subr.mxu0 0.0
  %771 = vmatpush2.msra.mxu0 0.0
  %772 = vmatprep.subr.mxu0 0.0
  %773 = vmatpush2.msra.mxu0 0.0
  %774 = vmatprep.subr.mxu0 0.0
  %775 = vmatpush2.msra.mxu0 0.0
  %776 = vmatprep.subr.mxu0 0.0
  %777 = vmatpush2.msra.mxu0 0.0
  %778 = vmatprep.subr.mxu0 0.0
  %779 = vmatpush2.msra.mxu0 0.0
  %780 = vmatprep.subr.mxu0 0.0
  %781 = vmatpush2.msra.mxu0 0.0
  %782 = vmatprep.subr.mxu0 0.0
  %783 = vmatpush2.msra.mxu0 0.0
  %784 = vmatprep.subr.mxu0 0.0
  %785 = vmatpush2.msra.mxu0 0.0
  %786 = vmatprep.subr.mxu0 0.0
  %787 = vmatpush2.msra.mxu0 0.0
  %788 = vmatprep.subr.mxu0 0.0
  %789 = vmatpush2.msra.mxu0 0.0
  %790 = vmatprep.subr.mxu0 0.0
  %791 = vmatpush2.msra.mxu0 0.0
  %792 = vmatprep.mubr.f32.mxu0 0.0
  %793 = vmatmul.mubr.f32.gmra.mxu0 %v705
  %v794 = vpop.f32.mrf.mxu0
  %v795 = vadd.f32 0.0, %v794
  %v796 = vpop.f32.mrf.mxu0
  %797 = vmatprep.mubr.f32.mxu0 0.0
  %798 = vmatmul.mubr.f32.gmra.mxu0 %v708
  %v799 = vpop.f32.mrf.mxu0
  %v800 = vadd.f32 0.0, %v799
  %v801 = vpop.f32.mrf.mxu0
  %802 = vmatprep.mubr.f32.mxu0 0.0
  %803 = vmatmul.mubr.f32.gmra.mxu0 %v711
  %v804 = vpop.f32.mrf.mxu0
  %v805 = vadd.f32 0.0, %v804
  %v806 = vpop.f32.mrf.mxu0
  %807 = vmatprep.mubr.f32.mxu0 0.0
  %808 = vmatmul.mubr.f32.gmra.mxu0 %v714
  %v809 = vpop.f32.mrf.mxu0
  %v810 = vadd.f32 0.0, %v809
  %v811 = vpop.f32.mrf.mxu0
  %812 = vmatprep.mubr.f32.mxu0 0.0
  %813 = vmatmul.mubr.f32.gmra.mxu0 %v717
  %v814 = vpop.f32.mrf.mxu0
  %v815 = vadd.f32 0.0, %v814
  %v816 = vpop.f32.mrf.mxu0
  %817 = vmatprep.mubr.f32.mxu0 0.0
  %818 = vmatmul.mubr.f32.gmra.mxu0 %v720
  %v819 = vpop.f32.mrf.mxu0
  %v820 = vadd.f32 0.0, %v819
  %v821 = vpop.f32.mrf.mxu0
  %822 = vmatprep.mubr.f32.mxu0 0.0
  %823 = vmatmul.mubr.f32.gmra.mxu0 %v723
  %v824 = vpop.f32.mrf.mxu0
  %v825 = vadd.f32 0.0, %v824
  %v826 = vpop.f32.mrf.mxu0
  %827 = vmatprep.mubr.f32.mxu0 0.0
  %828 = vmatmul.mubr.f32.gmra.mxu0 %v726
  %v829 = vpop.f32.mrf.mxu0
  %v830 = vadd.f32 0.0, %v829
  %v831 = vpop.f32.mrf.mxu0
  %832 = vdwg.mxu0
  %833 = vmatprep.subr.mxu0 0.0
  %834 = vmatpush1.msra.mxu0 0.0
  %835 = vmatprep.subr.mxu0 0.0
  %836 = vmatpush1.msra.mxu0 0.0
  %837 = vmatprep.subr.mxu0 0.0
  %838 = vmatpush1.msra.mxu0 0.0
  %839 = vmatprep.subr.mxu0 0.0
  %840 = vmatpush1.msra.mxu0 0.0
  %841 = vmatprep.subr.mxu0 0.0
  %842 = vmatpush1.msra.mxu0 0.0
  %843 = vmatprep.subr.mxu0 0.0
  %844 = vmatpush1.msra.mxu0 0.0
  %845 = vmatprep.subr.mxu0 0.0
  %846 = vmatpush1.msra.mxu0 0.0
  %847 = vmatprep.subr.mxu0 0.0
  %848 = vmatpush1.msra.mxu0 0.0
  %849 = vmatprep.subr.mxu0 0.0
  %850 = vmatpush1.msra.mxu0 %v830
  %851 = vmatprep.subr.mxu0 0.0
  %852 = vmatpush1.msra.mxu0 %v825
  %853 = vmatprep.subr.mxu0 0.0
  %854 = vmatpush1.msra.mxu0 %v820
  %855 = vmatprep.subr.mxu0 0.0
  %856 = vmatpush1.msra.mxu0 %v815
  %857 = vmatprep.subr.mxu0 0.0
  %858 = vmatpush1.msra.mxu0 %v810
  %859 = vmatprep.subr.mxu0 0.0
  %860 = vmatpush1.msra.mxu0 %v805
  %861 = vmatprep.subr.mxu0 0.0
  %862 = vmatpush1.msra.mxu0 %v800
  %863 = vmatprep.subr.mxu0 0.0
  %864 = vmatpush1.msra.mxu0 %v795
  %865 = vmatprep.subr.mxu0 0.0
  %866 = vmatpush2.msra.mxu0 0.0
  %867 = vmatprep.subr.mxu0 0.0
  %868 = vmatpush2.msra.mxu0 0.0
  %869 = vmatprep.subr.mxu0 0.0
  %870 = vmatpush2.msra.mxu0 0.0
  %871 = vmatprep.subr.mxu0 0.0
  %872 = vmatpush2.msra.mxu0 0.0
  %873 = vmatprep.subr.mxu0 0.0
  %874 = vmatpush2.msra.mxu0 0.0
  %875 = vmatprep.subr.mxu0 0.0
  %876 = vmatpush2.msra.mxu0 0.0
  %877 = vmatprep.subr.mxu0 0.0
  %878 = vmatpush2.msra.mxu0 0.0
  %879 = vmatprep.subr.mxu0 0.0
  %880 = vmatpush2.msra.mxu0 0.0
  %881 = vmatprep.subr.mxu0 0.0
  %882 = vmatpush2.msra.mxu0 0.0
  %883 = vmatprep.subr.mxu0 0.0
  %884 = vmatpush2.msra.mxu0 0.0
  %885 = vmatprep.subr.mxu0 0.0
  %886 = vmatpush2.msra.mxu0 0.0
  %887 = vmatprep.subr.mxu0 0.0
  %888 = vmatpush2.msra.mxu0 0.0
  %889 = vmatprep.subr.mxu0 0.0
  %890 = vmatpush2.msra.mxu0 0.0
  %891 = vmatprep.subr.mxu0 0.0
  %892 = vmatpush2.msra.mxu0 0.0
  %893 = vmatprep.subr.mxu0 0.0
  %894 = vmatpush2.msra.mxu0 0.0
  %895 = vmatprep.subr.mxu0 0.0
  %896 = vmatpush2.msra.mxu0 0.0
  %897 = vmatprep.mubr.f32.mxu0 0.0
  %898 = vmatmul.mubr.f32.gmra.mxu0 %v418
  %v899 = vpop.f32.mrf.mxu0
  %v900 = vadd.f32 0.0, %v899
  %v901 = vpop.f32.mrf.mxu0
  %902 = vmatprep.mubr.f32.mxu0 0.0
  %903 = vmatmul.mubr.f32.gmra.mxu0 %v421
  %v904 = vpop.f32.mrf.mxu0
  %v905 = vadd.f32 0.0, %v904
  %v906 = vpop.f32.mrf.mxu0
  %907 = vmatprep.mubr.f32.mxu0 0.0
  %908 = vmatmul.mubr.f32.gmra.mxu0 %v424
  %v909 = vpop.f32.mrf.mxu0
  %v910 = vadd.f32 0.0, %v909
  %v911 = vpop.f32.mrf.mxu0
  %912 = vmatprep.mubr.f32.mxu0 0.0
  %913 = vmatmul.mubr.f32.gmra.mxu0 %v427
  %v914 = vpop.f32.mrf.mxu0
  %v915 = vadd.f32 0.0, %v914
  %v916 = vpop.f32.mrf.mxu0
  %917 = vmatprep.mubr.f32.mxu0 0.0
  %918 = vmatmul.mubr.f32.gmra.mxu0 %v430
  %v919 = vpop.f32.mrf.mxu0
  %v920 = vadd.f32 0.0, %v919
  %v921 = vpop.f32.mrf.mxu0
  %922 = vmatprep.mubr.f32.mxu0 0.0
  %923 = vmatmul.mubr.f32.gmra.mxu0 %v433
  %v924 = vpop.f32.mrf.mxu0
  %v925 = vadd.f32 0.0, %v924
  %v926 = vpop.f32.mrf.mxu0
  %927 = vmatprep.mubr.f32.mxu0 0.0
  %928 = vmatmul.mubr.f32.gmra.mxu0 %v436
  %v929 = vpop.f32.mrf.mxu0
  %v930 = vadd.f32 0.0, %v929
  %v931 = vpop.f32.mrf.mxu0
  %932 = vmatprep.mubr.f32.mxu0 0.0
  %933 = vmatmul.mubr.f32.gmra.mxu0 %v439
  %v934 = vpop.f32.mrf.mxu0
  %v935 = vadd.f32 0.0, %v934
  %v936 = vpop.f32.mrf.mxu0
  %937 = vdwg.mxu0
  %v938 = vmul.f32 %v900, 0.0078125
  %v939 = vmul.f32 %v905, 0.0078125
  %v940 = vmul.f32 %v910, 0.0078125
  %v941 = vmul.f32 %v915, 0.0078125
  %v942 = vmul.f32 %v920, 0.0078125
  %v943 = vmul.f32 %v925, 0.0078125
  %v944 = vmul.f32 %v930, 0.0078125
  %v945 = vmul.f32 %v935, 0.0078125
  %v946 = vadd.f32 %v938, 1e-05
  %v947 = vadd.f32 %v939, 1e-05
  %v948 = vadd.f32 %v940, 1e-05
  %v949 = vadd.f32 %v941, 1e-05
  %v950 = vadd.f32 %v942, 1e-05
  %v951 = vadd.f32 %v943, 1e-05
  %v952 = vadd.f32 %v944, 1e-05
  %v953 = vadd.f32 %v945, 1e-05
  %v954 = vrsqrt.pop %v946
  %v955 = vrsqrt.pop %v947
  %v956 = vrsqrt.pop %v948
  %v957 = vrsqrt.pop %v949
  %v958 = vrsqrt.pop %v950
  %v959 = vrsqrt.pop %v951
  %v960 = vrsqrt.pop %v952
  %v961 = vrsqrt.pop %v953
  %962 = vset.pattern.permute.xlu0 1
  %963 = vperm.xlu0 %962, %v24
  %v964 = vpop.permute.xlu0 %963
  %966 = vset.pattern.permute.xlu0 1
  %967 = vperm.xlu0 %966, %v25
  %v968 = vpop.permute.xlu0 %967
  %970 = vset.pattern.permute.xlu0 1
  %971 = vperm.xlu0 %970, %v26
  %v972 = vpop.permute.xlu0 %971
  %974 = vset.pattern.permute.xlu0 1
  %975 = vperm.xlu0 %974, %v27
  %v976 = vpop.permute.xlu0 %975
  %978 = vset.pattern.permute.xlu0 1
  %979 = vperm.xlu0 %978, %v28
  %v980 = vpop.permute.xlu0 %979
  %982 = vset.pattern.permute.xlu0 1
  %983 = vperm.xlu0 %982, %v29
  %v984 = vpop.permute.xlu0 %983
  %986 = vset.pattern.permute.xlu0 1
  %987 = vperm.xlu0 %986, %v30
  %v988 = vpop.permute.xlu0 %987
  %990 = vset.pattern.permute.xlu0 1
  %991 = vperm.xlu0 %990, %v31
  %v992 = vpop.permute.xlu0 %991
  %v994 = vmul.f32 %v954, %v964
  %v995 = vmul.f32 %v955, %v968
  %v996 = vmul.f32 %v956, %v972
  %v997 = vmul.f32 %v957, %v976
  %v998 = vmul.f32 %v958, %v980
  %v999 = vmul.f32 %v959, %v984
  %v1000 = vmul.f32 %v960, %v988
  %v1001 = vmul.f32 %v961, %v992
  %v1003 = vsel %vm554, %v994, 0
  %v1006 = vsel %vm554, %v995, 0
  %v1009 = vsel %vm554, %v996, 0
  %v1012 = vsel %vm554, %v997, 0
  %v1015 = vsel %vm554, %v998, 0
  %v1018 = vsel %vm554, %v999, 0
  %v1021 = vsel %vm554, %v1000, 0
  %v1024 = vsel %vm554, %v1001, 0
  %1026 = vmatprep.subr.mxu0 0.0
  %1027 = vmatpush1.msra.mxu0 0.0
  %1028 = vmatprep.subr.mxu0 0.0
  %1029 = vmatpush1.msra.mxu0 0.0
  %1030 = vmatprep.subr.mxu0 0.0
  %1031 = vmatpush1.msra.mxu0 0.0
  %1032 = vmatprep.subr.mxu0 0.0
  %1033 = vmatpush1.msra.mxu0 0.0
  %1034 = vmatprep.subr.mxu0 0.0
  %1035 = vmatpush1.msra.mxu0 0.0
  %1036 = vmatprep.subr.mxu0 0.0
  %1037 = vmatpush1.msra.mxu0 0.0
  %1038 = vmatprep.subr.mxu0 0.0
  %1039 = vmatpush1.msra.mxu0 0.0
  %1040 = vmatprep.subr.mxu0 0.0
  %1041 = vmatpush1.msra.mxu0 0.0
  %1042 = vmatprep.subr.mxu0 0.0
  %1043 = vmatpush1.msra.mxu0 0.0
  %1044 = vmatprep.subr.mxu0 0.0
  %1045 = vmatpush1.msra.mxu0 0.0
  %1046 = vmatprep.subr.mxu0 0.0
  %1047 = vmatpush1.msra.mxu0 0.0
  %1048 = vmatprep.subr.mxu0 0.0
  %1049 = vmatpush1.msra.mxu0 0.0
  %1050 = vmatprep.subr.mxu0 0.0
  %1051 = vmatpush1.msra.mxu0 0.0
  %1052 = vmatprep.subr.mxu0 0.0
  %1053 = vmatpush1.msra.mxu0 0.0
  %1054 = vmatprep.subr.mxu0 0.0
  %1055 = vmatpush1.msra.mxu0 0.0
  %1056 = vmatprep.subr.mxu0 0.0
  %1057 = vmatpush1.msra.mxu0 %v581
  %1058 = vmatprep.subr.mxu0 0.0
  %1059 = vmatpush2.msra.mxu0 0.0
  %1060 = vmatprep.subr.mxu0 0.0
  %1061 = vmatpush2.msra.mxu0 0.0
  %1062 = vmatprep.subr.mxu0 0.0
  %1063 = vmatpush2.msra.mxu0 0.0
  %1064 = vmatprep.subr.mxu0 0.0
  %1065 = vmatpush2.msra.mxu0 0.0
  %1066 = vmatprep.subr.mxu0 0.0
  %1067 = vmatpush2.msra.mxu0 0.0
  %1068 = vmatprep.subr.mxu0 0.0
  %1069 = vmatpush2.msra.mxu0 0.0
  %1070 = vmatprep.subr.mxu0 0.0
  %1071 = vmatpush2.msra.mxu0 0.0
  %1072 = vmatprep.subr.mxu0 0.0
  %1073 = vmatpush2.msra.mxu0 0.0
  %1074 = vmatprep.subr.mxu0 0.0
  %1075 = vmatpush2.msra.mxu0 0.0
  %1076 = vmatprep.subr.mxu0 0.0
  %1077 = vmatpush2.msra.mxu0 0.0
  %1078 = vmatprep.subr.mxu0 0.0
  %1079 = vmatpush2.msra.mxu0 0.0
  %1080 = vmatprep.subr.mxu0 0.0
  %1081 = vmatpush2.msra.mxu0 0.0
  %1082 = vmatprep.subr.mxu0 0.0
  %1083 = vmatpush2.msra.mxu0 0.0
  %1084 = vmatprep.subr.mxu0 0.0
  %1085 = vmatpush2.msra.mxu0 0.0
  %1086 = vmatprep.subr.mxu0 0.0
  %1087 = vmatpush2.msra.mxu0 0.0
  %1088 = vmatprep.subr.mxu0 0.0
  %1089 = vmatpush2.msra.mxu0 0.0
  %1090 = vmatprep.mubr.f32.mxu0 0.0
  %1091 = vmatmul.mubr.f32.gmra.mxu0 %v1003
  %v1092 = vpop.f32.mrf.mxu0
  %v1093 = vadd.f32 0.0, %v1092
  %v1094 = vpop.f32.mrf.mxu0
  %1095 = vmatprep.mubr.f32.mxu0 0.0
  %1096 = vmatmul.mubr.f32.gmra.mxu0 %v1006
  %v1097 = vpop.f32.mrf.mxu0
  %v1098 = vadd.f32 0.0, %v1097
  %v1099 = vpop.f32.mrf.mxu0
  %1100 = vmatprep.mubr.f32.mxu0 0.0
  %1101 = vmatmul.mubr.f32.gmra.mxu0 %v1009
  %v1102 = vpop.f32.mrf.mxu0
  %v1103 = vadd.f32 0.0, %v1102
  %v1104 = vpop.f32.mrf.mxu0
  %1105 = vmatprep.mubr.f32.mxu0 0.0
  %1106 = vmatmul.mubr.f32.gmra.mxu0 %v1012
  %v1107 = vpop.f32.mrf.mxu0
  %v1108 = vadd.f32 0.0, %v1107
  %v1109 = vpop.f32.mrf.mxu0
  %1110 = vmatprep.mubr.f32.mxu0 0.0
  %1111 = vmatmul.mubr.f32.gmra.mxu0 %v1015
  %v1112 = vpop.f32.mrf.mxu0
  %v1113 = vadd.f32 0.0, %v1112
  %v1114 = vpop.f32.mrf.mxu0
  %1115 = vmatprep.mubr.f32.mxu0 0.0
  %1116 = vmatmul.mubr.f32.gmra.mxu0 %v1018
  %v1117 = vpop.f32.mrf.mxu0
  %v1118 = vadd.f32 0.0, %v1117
  %v1119 = vpop.f32.mrf.mxu0
  %1120 = vmatprep.mubr.f32.mxu0 0.0
  %1121 = vmatmul.mubr.f32.gmra.mxu0 %v1021
  %v1122 = vpop.f32.mrf.mxu0
  %v1123 = vadd.f32 0.0, %v1122
  %v1124 = vpop.f32.mrf.mxu0
  %1125 = vmatprep.mubr.f32.mxu0 0.0
  %1126 = vmatmul.mubr.f32.gmra.mxu0 %v1024
  %v1127 = vpop.f32.mrf.mxu0
  %v1128 = vadd.f32 0.0, %v1127
  %v1129 = vpop.f32.mrf.mxu0
  %1130 = vdwg.mxu0
  %v1131 = vmul.f32 %v688, %v1093
  %v1132 = vmul.f32 %v689, %v1098
  %v1133 = vmul.f32 %v690, %v1103
  %v1134 = vmul.f32 %v691, %v1108
  %v1135 = vmul.f32 %v692, %v1113
  %v1136 = vmul.f32 %v693, %v1118
  %v1137 = vmul.f32 %v694, %v1123
  %v1138 = vmul.f32 %v695, %v1128
  %1139 = vset.pattern.permute.xlu0 2
  %1140 = vperm.xlu0 %1139, %v24
  %v1141 = vpop.permute.xlu0 %1140
  %1143 = vset.pattern.permute.xlu0 2
  %1144 = vperm.xlu0 %1143, %v25
  %v1145 = vpop.permute.xlu0 %1144
  %1147 = vset.pattern.permute.xlu0 2
  %1148 = vperm.xlu0 %1147, %v26
  %v1149 = vpop.permute.xlu0 %1148
  %1151 = vset.pattern.permute.xlu0 2
  %1152 = vperm.xlu0 %1151, %v27
  %v1153 = vpop.permute.xlu0 %1152
  %1155 = vset.pattern.permute.xlu0 2
  %1156 = vperm.xlu0 %1155, %v28
  %v1157 = vpop.permute.xlu0 %1156
  %1159 = vset.pattern.permute.xlu0 2
  %1160 = vperm.xlu0 %1159, %v29
  %v1161 = vpop.permute.xlu0 %1160
  %1163 = vset.pattern.permute.xlu0 2
  %1164 = vperm.xlu0 %1163, %v30
  %v1165 = vpop.permute.xlu0 %1164
  %1167 = vset.pattern.permute.xlu0 2
  %1168 = vperm.xlu0 %1167, %v31
  %v1169 = vpop.permute.xlu0 %1168
  %v1171 = vadd.f32 %v1131, %v1141
  %v1172 = vadd.f32 %v1132, %v1145
  %v1173 = vadd.f32 %v1133, %v1149
  %v1174 = vadd.f32 %v1134, %v1153
  %v1175 = vadd.f32 %v1135, %v1157
  %v1176 = vadd.f32 %v1136, %v1161
  %v1177 = vadd.f32 %v1137, %v1165
  %v1178 = vadd.f32 %v1138, %v1169
  %v1179 = vmin.f32 %v1171, 20.0
  %v1180 = vmin.f32 %v1172, 20.0
  %v1181 = vmin.f32 %v1173, 20.0
  %v1182 = vmin.f32 %v1174, 20.0
  %v1183 = vmin.f32 %v1175, 20.0
  %v1184 = vmin.f32 %v1176, 20.0
  %v1185 = vmin.f32 %v1177, 20.0
  %v1186 = vmin.f32 %v1178, 20.0
  %v1187 = vmul.f32 %v1179, 1.442695
  %v1188 = vpow.pop %v1187
  %v1189 = vmul.f32 %v1180, 1.442695
  %v1190 = vpow.pop %v1189
  %v1191 = vmul.f32 %v1181, 1.442695
  %v1192 = vpow.pop %v1191
  %v1193 = vmul.f32 %v1182, 1.442695
  %v1194 = vpow.pop %v1193
  %v1195 = vmul.f32 %v1183, 1.442695
  %v1196 = vpow.pop %v1195
  %v1197 = vmul.f32 %v1184, 1.442695
  %v1198 = vpow.pop %v1197
  %v1199 = vmul.f32 %v1185, 1.442695
  %v1200 = vpow.pop %v1199
  %v1201 = vmul.f32 %v1186, 1.442695
  %v1202 = vpow.pop %v1201
  %v1203 = vadd.f32 %v1188, 1.0
  %v1204 = vadd.f32 %v1190, 1.0
  %v1205 = vadd.f32 %v1192, 1.0
  %v1206 = vadd.f32 %v1194, 1.0
  %v1207 = vadd.f32 %v1196, 1.0
  %v1208 = vadd.f32 %v1198, 1.0
  %v1209 = vadd.f32 %v1200, 1.0
  %v1210 = vadd.f32 %v1202, 1.0
  %v1211 = vmul.f32 %v1203, %v1203
  %v1212 = vmul.f32 %v1204, %v1204
  %v1213 = vmul.f32 %v1205, %v1205
  %v1214 = vmul.f32 %v1206, %v1206
  %v1215 = vmul.f32 %v1207, %v1207
  %v1216 = vmul.f32 %v1208, %v1208
  %v1217 = vmul.f32 %v1209, %v1209
  %v1218 = vmul.f32 %v1210, %v1210
  %v1219 = vsub.f32 %v1211, 1.0
  %v1220 = vsub.f32 %v1212, 1.0
  %v1221 = vsub.f32 %v1213, 1.0
  %v1222 = vsub.f32 %v1214, 1.0
  %v1223 = vsub.f32 %v1215, 1.0
  %v1224 = vsub.f32 %v1216, 1.0
  %v1225 = vsub.f32 %v1217, 1.0
  %v1226 = vsub.f32 %v1218, 1.0
  %v1227 = vadd.f32 %v1211, 1.0
  %v1228 = vadd.f32 %v1212, 1.0
  %v1229 = vadd.f32 %v1213, 1.0
  %v1230 = vadd.f32 %v1214, 1.0
  %v1231 = vadd.f32 %v1215, 1.0
  %v1232 = vadd.f32 %v1216, 1.0
  %v1233 = vadd.f32 %v1217, 1.0
  %v1234 = vadd.f32 %v1218, 1.0
  %v1235 = vrcp.pop %v1227
  %v1236 = vrcp.pop %v1228
  %v1237 = vrcp.pop %v1229
  %v1238 = vrcp.pop %v1230
  %v1239 = vrcp.pop %v1231
  %v1240 = vrcp.pop %v1232
  %v1241 = vrcp.pop %v1233
  %v1242 = vrcp.pop %v1234
  %v1243 = vmul.f32 %v1219, %v1235
  %v1244 = vmul.f32 %v1220, %v1236
  %v1245 = vmul.f32 %v1221, %v1237
  %v1246 = vmul.f32 %v1222, %v1238
  %v1247 = vmul.f32 %v1223, %v1239
  %v1248 = vmul.f32 %v1224, %v1240
  %v1249 = vmul.f32 %v1225, %v1241
  %v1250 = vmul.f32 %v1226, %v1242
  %v1251 = vmul.f32 %v1171, %v1243
  %v1252 = vmul.f32 %v1172, %v1244
  %v1253 = vmul.f32 %v1173, %v1245
  %v1254 = vmul.f32 %v1174, %v1246
  %v1255 = vmul.f32 %v1175, %v1247
  %v1256 = vmul.f32 %v1176, %v1248
  %v1257 = vmul.f32 %v1177, %v1249
  %v1258 = vmul.f32 %v1178, %v1250
  %1259 = vst.msk [vmem:[%s6] sm:$0xff] %vm196, %v1251
  %1260 = vst.msk [vmem:[%s6 + $0x8] sm:$0xff] %vm196, %v1252
  %1261 = vst.msk [vmem:[%s6 + $0x10] sm:$0xff] %vm196, %v1253
  %1262 = vst.msk [vmem:[%s6 + $0x18] sm:$0xff] %vm196, %v1254
  %1263 = vst.msk [vmem:[%s6 + $0x20] sm:$0xff] %vm196, %v1255
  %1264 = vst.msk [vmem:[%s6 + $0x28] sm:$0xff] %vm196, %v1256
  %1265 = vst.msk [vmem:[%s6 + $0x30] sm:$0xff] %vm196, %v1257
  %1266 = vst.msk [vmem:[%s6 + $0x38] sm:$0xff] %vm196, %v1258
  // Predicated region
  $region26: #{conv1d_block.1} parent=0 // pred_check
    _
  $region27: #{conv1d_block.1} parent=0 // pred_check_branch
    %1268 = sbr.rel (0) target = $region29
  $region28: #{conv1d_block.1} parent=0 // pred_region
    _
  $region29: #{conv1d_block.1} parent=0 // pred_fallthru
    _
  // Predicated region
  $region30: #{conv1d_block.1} parent=0 // pred_check
    _
  $region31: #{conv1d_block.1} parent=0 // pred_check_branch
    %1270 = sbr.rel (0) target = $region33
  $region32: #{conv1d_block.1} parent=0 // pred_region
    _
  $region33: #{conv1d_block.1} parent=0 // pred_fallthru
    _

</llo_original>
